<compile_context>
chip_gen: v6e
topology: v6e:2x2x1
jax: 0.10.0
libtpu: 0.0.40
codegen_flags: <defaults>
</compile_context>

<pallas_src>
import functools

import jax
import jax.numpy as jnp
from jax.experimental import pallas as pl
from jax.experimental.pallas import tpu as pltpu


def _rmsnorm_kernel(x_ref, w_ref, o_ref, *, eps: float, inv_hidden: float):
    # Hot path: squared-sum reduction over the last axis (times static 1/H,
    # avoiding a vector divide) + elementwise scale, all in fp32 inside VMEM,
    # then cast back to the input dtype on store.  rsqrt lowers to the EUP
    # slot, which is essentially free on a mem-bound kernel.
    x = x_ref[...].astype(jnp.float32)                        # [tm, H] fp32
    v = jnp.sum(x * x, axis=-1, keepdims=True) * inv_hidden   # [tm, 1]
    inv = jax.lax.rsqrt(v + eps)                              # [tm, 1] (EUP)
    # w_ref is already fp32 (cast hoisted to the wrapper, resident tile).
    o_ref[...] = (w_ref[...] * (x * inv)).astype(o_ref.dtype)  # [tm, H]


def _tpu_vmem_capacity_bytes() -> int:
    """Trace-time VMEM capacity query with a conservative (v7x-sized) fallback."""
    try:
        info = pltpu.get_tpu_info()
        cap = int(getattr(info, "vmem_capacity_bytes", 0))
        if cap > 0:
            return cap
    except Exception:
        pass
    return 64 * 1024 * 1024


def _pick_tiling(rows: int, hidden: int, itemsize: int):
    """Choose (row_tile, vmem_limit_bytes), generation-aware.

    Keeps double-buffered in/out tiles plus live fp32 intermediates inside a
    per-generation tile budget, lifts the old 1024-row cap, and guarantees at
    least 2 grid steps (when rows >= 16) so v7x's two TensorCores both get work.
    """
    vmem_cap = _tpu_vmem_capacity_bytes()
    if vmem_cap >= 100 * 1024 * 1024:
        # v5e / v6e: 128 MiB physical VMEM -> use it.
        tile_budget = 48 * 1024 * 1024
        vmem_limit = 96 * 1024 * 1024
    else:
        # v7x: 64 MiB VMEM per TensorCore -> stay conservative.
        tile_budget = 20 * 1024 * 1024
        vmem_limit = 48 * 1024 * 1024

    if rows <= 8:
        # Tiny slab: single full-extent block (full-extent block dims are legal).
        return rows, vmem_limit

    # Per element of a [tm, hidden] row tile:
    #   2 pipeline buffers * (input tile + output tile)  -> 4 * itemsize
    #   live fp32 temporaries (x.astype(f32), w*(x*inv)) -> ~12 bytes
    bytes_per_elem = 4 * itemsize + 12
    tm = tile_budget // max(hidden * bytes_per_elem, 1)
    tm = max(8, min(int(tm), 8192))       # lifted row cap (was 1024)
    tm = (tm // 8) * 8                    # sublane multiple

    nblk = -(-rows // tm)
    if rows >= 16:
        # >= 2 grid steps: lets the "parallel" row axis shard across both
        # TensorCores on v7x instead of collapsing to grid=(1,).
        nblk = max(nblk, 2)

    tm = ((-(-rows // nblk)) + 7) // 8 * 8  # even split, multiple of 8
    tm = max(8, min(tm, rows))
    return tm, vmem_limit


def rmsnorm(x: jax.Array, weight: jax.Array, eps: float = 1e-6) -> jax.Array:
    """RMSNorm over the last axis of `x`. Returns array with x's dtype/shape."""
    orig_shape = x.shape
    hidden = orig_shape[-1]
    rows = 1
    for d in orig_shape[:-1]:
        rows *= d

    x2d = x.reshape(rows, hidden)
    # Hoist the per-step weight cast: resident (1, H) tile is fp32 already.
    w2d = weight.reshape(1, hidden).astype(jnp.float32)

    tm, vmem_limit = _pick_tiling(rows, hidden, jnp.dtype(x.dtype).itemsize)
    grid = (pl.cdiv(rows, tm),)

    # NOTE: for best store efficiency `hidden` should be a multiple of 128
    # (lane-dense output -> unmasked vst). Small hidden (<128) is still correct
    # since the last block dim equals the full array dim.
    # TODO(synk): for hidden < 128, fold several rows into the lane axis in the
    # wrapper (segmented lane reduction) to avoid masked vst.msk partial stores.
    kernel = functools.partial(
        _rmsnorm_kernel, eps=float(eps), inv_hidden=1.0 / float(hidden)
    )

    out2d = pl.pallas_call(
        kernel,
        out_shape=jax.ShapeDtypeStruct((rows, hidden), x.dtype),
        grid_spec=pltpu.PrefetchScalarGridSpec(
            num_scalar_prefetch=0,
            grid=grid,
            in_specs=[
                pl.BlockSpec((tm, hidden), lambda i: (i, 0)),
                # Constant block index: weight tile stays resident, no re-DMA.
                pl.BlockSpec((1, hidden), lambda i: (0, 0)),
            ],
            out_specs=pl.BlockSpec((tm, hidden), lambda i: (i, 0)),
        ),
        compiler_params=pltpu.CompilerParams(
            # Row axis is fully data-parallel -> megacore sharding on v7x.
            dimension_semantics=("parallel",),
            # Generation-aware scoped VMEM limit (96 MiB on v5e/v6e, 48 on v7x).
            vmem_limit_bytes=vmem_limit,
        ),
    )(x2d, w2d)

    return out2d.reshape(orig_shape)


def _reference(x, weight, eps=1e-6):
    xf = x.astype(jnp.float32)
    v = jnp.mean(xf * xf, axis=-1, keepdims=True)
    y = weight.astype(jnp.float32) * (xf * jax.lax.rsqrt(v + eps))
    return y.astype(x.dtype)


if __name__ == "__main__":
    # Shapes implied by the module's forward: (..., hidden), weight: (hidden,)
    batch, seq, hidden = 2, 8, 32
    key = jax.random.PRNGKey(0)
    kx, kw = jax.random.split(key)

    x = jax.random.normal(kx, (batch, seq, hidden), dtype=jnp.float32).astype(
        jnp.bfloat16
    )
    # Deterministic parameter init (synthetic, no checkpoint load).
    weight = 1.0 + 0.01 * jax.random.normal(kw, (hidden,), dtype=jnp.float32)

    out = rmsnorm(x, weight, eps=1e-6)
    out = jax.block_until_ready(out)

    ref = _reference(x, weight, eps=1e-6)
    assert out.shape == x.shape and out.dtype == x.dtype
    assert jnp.allclose(
        out.astype(jnp.float32), ref.astype(jnp.float32), atol=2e-2, rtol=2e-2
    )

    print("KERNEL_OK")
</pallas_src>

<mosaic_0001>
module attributes {stable_mosaic.version = 11 : i64} {
  func.func @_rmsnorm_kernel(%arg0: i32, %arg1: memref<8x32xbf16, #tpu.memory_space<vmem>>, %arg2: memref<1x32xf32, #tpu.memory_space<vmem>>, %arg3: memref<8x32xbf16, #tpu.memory_space<vmem>>) attributes {dimension_semantics = [#tpu.dimension_semantics<parallel>], iteration_bounds = array<i64: 2>, scalar_prefetch = 0 : i64, scratch_operands = 0 : i64, tpu.core_type = #tpu.core_type<tc>, window_params = [{transform_indices = @transform_0, window_bounds = array<i64: 8, 32>}, {pipeline_mode = #tpu.pipeline_mode<synchronous>, transform_indices = @transform_1, window_bounds = array<i64: 1, 32>}, {transform_indices = @transform_2, window_bounds = array<i64: 8, 32>}]} {
    %c0 = arith.constant 0 : index
    %c0_0 = arith.constant 0 : index
    %0 = vector.load %arg1[%c0, %c0_0] : memref<8x32xbf16, #tpu.memory_space<vmem>>, vector<8x32xbf16>
    %1 = arith.extf %0 : vector<8x32xbf16> to vector<8x32xf32>
    %2 = arith.mulf %1, %1 : vector<8x32xf32>
    %cst = arith.constant dense<0.000000e+00> : vector<8xf32>
    %3 = vector.multi_reduction <add>, %2, %cst [1] : vector<8x32xf32> to vector<8xf32>
    %4 = vector.shape_cast %3 : vector<8xf32> to vector<8x1xf32>
    %cst_1 = arith.constant 3.125000e-02 : f32
    %5 = vector.broadcast %cst_1 : f32 to vector<8x1xf32>
    %6 = arith.mulf %4, %5 : vector<8x1xf32>
    %cst_2 = arith.constant 9.99999997E-7 : f32
    %7 = vector.broadcast %cst_2 : f32 to vector<8x1xf32>
    %8 = arith.addf %6, %7 : vector<8x1xf32>
    %9 = math.rsqrt %8 : vector<8x1xf32>
    %c0_3 = arith.constant 0 : index
    %c0_4 = arith.constant 0 : index
    %10 = vector.load %arg2[%c0_3, %c0_4] : memref<1x32xf32, #tpu.memory_space<vmem>>, vector<1x32xf32>
    %11 = vector.broadcast %9 : vector<8x1xf32> to vector<8x32xf32>
    %12 = arith.mulf %1, %11 : vector<8x32xf32>
    %13 = vector.broadcast %10 : vector<1x32xf32> to vector<8x32xf32>
    %14 = arith.mulf %13, %12 : vector<8x32xf32>
    %15 = arith.truncf %14 : vector<8x32xf32> to vector<8x32xbf16>
    %c0_5 = arith.constant 0 : index
    %c0_6 = arith.constant 0 : index
    %16 = vector.load %arg3[%c0_5, %c0_6] : memref<8x32xbf16, #tpu.memory_space<vmem>>, vector<8x32xbf16>
    tpu.vector_store %arg3[%c0_5, %c0_6], %15 {strides = array<i32>} : memref<8x32xbf16, #tpu.memory_space<vmem>>, vector<8x32xbf16>,
    return
  }
  func.func @transform_0(%arg0: i32) -> (i32, i32) {
    %c0_i32 = arith.constant 0 : i32
    %c0_i32_0 = arith.constant 0 : i32
    return %arg0, %c0_i32 : i32, i32
  }
  func.func @transform_1(%arg0: i32) -> (i32, i32) {
    %c0_i32 = arith.constant 0 : i32
    %c0_i32_0 = arith.constant 0 : i32
    %c0_i32_1 = arith.constant 0 : i32
    return %c0_i32, %c0_i32_0 : i32, i32
  }
  func.func @transform_2(%arg0: i32) -> (i32, i32) {
    %c0_i32 = arith.constant 0 : i32
    %c0_i32_0 = arith.constant 0 : i32
    return %arg0, %c0_i32 : i32, i32
  }
}

</mosaic_0001>

<llo_original>
// kernel: tpu_custom_call.1
$region0: #{tpu_custom_call.1}
  #allocation0 [shape = 'u32[]', space=smem, size = 0x4, offset = 0x4, fixed_abs, tag = 'smem constant byte address 0x4 - core index']
  #allocation1 [shape = 'u32[144,128]{1,0:T(1,128)}', space=vmem, size = 0x12000, scoped, tag = 'internal scratch']
  %s0 = inlined_call_operand.hbm [shape: bf16[16,32], index: 0, kind: input, shape index: {}]
  %s1 = inlined_call_operand.vmem [shape: f32[1,32], index: 1, kind: input, shape index: {}]
  %s2 = inlined_call_operand.hbm [shape: bf16[16,32], index: 2, kind: output, shape index: {}]
  %s3 = sld [smem:[#allocation0]]
  $region45: #{tpu_custom_call.1} parent=0
    _
  %s5 = ssub.s32 1, %s3
  %s6 = scalar_select 0, %s5, %s3
  $region1: #{tpu_custom_call.1} parent=0
    #allocation2 [shape = 'u8[4096]{0}', space=vmem, size = 0x1000, scoped, tag = 'input window, operand 0']
    #allocation3 [shape = 's32[2]{0}', space=sflag, size = 0x8, scoped, tag = 'scoped memory for tpu_custom_call.1']
    #allocation4 [shape = 's32[2]{0}', space=sflag, size = 0x8, scoped, tag = 'scoped memory for tpu_custom_call.1']
    #allocation5 [shape = 'u8[4096]{0}', space=vmem, size = 0x1000, scoped, tag = 'output window, operand 0']
    %7 = vsyncpa [#allocation3], 0
    %s8 = scalar_lea.sflag [#allocation3], 1
    %9 = vsyncpa %s8, 0
    %10 = vsyncpa [#allocation4], 0
    %s11 = scalar_lea.sflag [#allocation4], 1
    %12 = vsyncpa %s11, 0
    loop: start=0, step=1, limit=4
    $region2: #{tpu_custom_call.1} parent=1 // loop_pre_header
      _
    $region3: #{tpu_custom_call.1} parent=1 // loop_header
      %s14 = sphi 0, %s18
      %p15 = scmp.ge.s32.totalorder %s14, 4
      %s24 = sphi 0, %s26
      %s27 = sphi 0, %s24
      %s28 = sphi 0, %s27
      %s44 = sphi 0, %s28
      %s48 = sphi 0, %s48
      %s50 = sphi 0, %s48
      %s51 = sphi 0, %s50
      %s65 = sphi 0, %s51
      %s71 = sphi 0, %s73
      %s74 = sphi 0, %s71
      %s75 = sphi 0, %s74
      %s91 = sphi 0, %s75
    $region4: #{tpu_custom_call.1} parent=1 // loop_header_branch
      %17 = sbr.rel (%p15) target = $region8
    $region5: #{tpu_custom_call.1} parent=1 // loop_body
      %s19 = ssub.s32 %s14, 1
      %s20 = ssub.s32 %s14, 2
      %s21 = sadd.s32 %s14, 1
      %s22 = ssub.s32 %s14, %s21
      %p23 = scmp.eq.s32.totalorder %s22, 0
      %s25 = sadd.s32 %s24, 1
      %s26 = scalar_select %p23, %s24, %s25
      %p29 = pneg %p23
      %p30 = scmp.eq.s32.totalorder %s14, 1
      %p31 = por %p29, %p30
      %p32 = scmp.ne.s32.totalorder %s24, %s27
      %p33 = scmp.eq.s32.totalorder %s14, 0
      %p34 = por %p32, %p33
      %p35 = scmp.ne.s32.totalorder %s24, %s27
      %p36 = scmp.eq.s32.totalorder %s19, 1
      %p37 = por %p35, %p36
      %p38 = scmp.ne.s32.totalorder %s27, %s28
      %p39 = scmp.eq.s32.totalorder %s19, 0
      %p40 = por %p38, %p39
      %p41 = scmp.ne.s32.totalorder %s27, %s28
      %p42 = scmp.eq.s32.totalorder %s20, 1
      %p43 = por %p41, %p42
      %p45 = scmp.ne.s32.totalorder %s28, %s44
      %p46 = scmp.eq.s32.totalorder %s20, 0
      %p47 = por %p45, %p46
      %s49 = sadd.s32 %s48, 1
      %p52 = scmp.eq.s32.totalorder %s14, 1
      %p53 = scmp.ne.s32.totalorder %s48, %s50
      %p54 = scmp.eq.s32.totalorder %s14, 0
      %p55 = por %p53, %p54
      %p56 = scmp.ne.s32.totalorder %s48, %s50
      %p57 = scmp.eq.s32.totalorder %s19, 1
      %p58 = por %p56, %p57
      %p59 = scmp.ne.s32.totalorder %s50, %s51
      %p60 = scmp.eq.s32.totalorder %s19, 0
      %p61 = por %p59, %p60
      %p62 = scmp.ne.s32.totalorder %s50, %s51
      %p63 = scmp.eq.s32.totalorder %s20, 1
      %p64 = por %p62, %p63
      %p66 = scmp.ne.s32.totalorder %s51, %s65
      %p67 = scmp.eq.s32.totalorder %s20, 0
      %p68 = por %p66, %p67
      %s69 = ssub.s32 %s14, %s21
      %p70 = scmp.eq.s32.totalorder %s69, 0
      %s72 = sadd.s32 %s71, 1
      %s73 = scalar_select %p70, %s71, %s72
      %p76 = pneg %p70
      %p77 = scmp.eq.s32.totalorder %s14, 1
      %p78 = por %p76, %p77
      %p79 = scmp.ne.s32.totalorder %s71, %s74
      %p80 = scmp.eq.s32.totalorder %s14, 0
      %p81 = por %p79, %p80
      %p82 = scmp.ne.s32.totalorder %s71, %s74
      %p83 = scmp.eq.s32.totalorder %s19, 1
      %p84 = por %p82, %p83
      %p85 = scmp.ne.s32.totalorder %s74, %s75
      %p86 = scmp.eq.s32.totalorder %s19, 0
      %p87 = por %p85, %p86
      %p88 = scmp.ne.s32.totalorder %s74, %s75
      %p89 = scmp.eq.s32.totalorder %s20, 1
      %p90 = por %p88, %p89
      %p92 = scmp.ne.s32.totalorder %s75, %s91
      %p93 = scmp.eq.s32.totalorder %s20, 0
      %p94 = por %p92, %p93
      %p95 = scmp.le.s32.totalorder 1, %s14
      %p96 = scmp.lt.s32.totalorder %s14, 3
      %p97 = pnand %p95, %p96
      %p98 = pneg %p97
      // Predicated region
      $region9: #{tpu_custom_call.1} parent=5 // pred_check
        _
      $region10: #{tpu_custom_call.1} parent=5 // pred_check_branch
        %100 = sbr.rel (%p97) target = $region12
      $region11: #{tpu_custom_call.1} parent=5 // pred_region
        %s101 = ssub.s32 %s14, 1
        // Predicated region
        $region13: #{tpu_custom_call.1} parent=11 // pred_check
          %p102 = pneg %p61
        $region14: #{tpu_custom_call.1} parent=11 // pred_check_branch
          %104 = sbr.rel (%p102) target = $region16
        $region15: #{tpu_custom_call.1} parent=11 // pred_region
          _
        $region16: #{tpu_custom_call.1} parent=11 // pred_fallthru
          _
      $region12: #{tpu_custom_call.1} parent=5 // pred_fallthru
        _
      %p105 = scmp.lt.s32.totalorder %s14, 2
      // Predicated region
      $region17: #{tpu_custom_call.1} parent=5 // pred_check
        %p106 = pneg %p105
      $region18: #{tpu_custom_call.1} parent=5 // pred_check_branch
        %108 = sbr.rel (%p106) target = $region20
      $region19: #{tpu_custom_call.1} parent=5 // pred_region
        // Predicated region
        $region21: #{tpu_custom_call.1} parent=19 // pred_check
          %p109 = pneg %p34
        $region22: #{tpu_custom_call.1} parent=19 // pred_check_branch
          %111 = sbr.rel (%p109) target = $region24
        $region23: #{tpu_custom_call.1} parent=19 // pred_region
          %s112 = sand.u32 %s24, 1
          %s113 = scalar_lea.sflag [#allocation3], %s112
          %s114 = sand.u32 %s24, 1
          %s115 = smul.addr %s114, 4
          %s116 = scalar_lea.vmem [#allocation2], %s115
          %s118 = ssub.s32 64, 64
          %119 = vsyncadd %s113, %s118
          %s120 = smul.addr %s14, 64
          %s121 = scalar_lea.hbm %s0, %s120
          %s123 = sshll.u32 %s116, 4
          %s124 = int_to_ptr.vmem [resolvable:$true] %s123
          %126 = dma.hbm_to_vmem [thread:$0]  %s121, 64, %s124, %s113
        $region24: #{tpu_custom_call.1} parent=19 // pred_fallthru
          _
      $region20: #{tpu_custom_call.1} parent=5 // pred_fallthru
        _
      %p127 = scmp.le.s32.totalorder 1, %s14
      %p128 = scmp.lt.s32.totalorder %s14, 3
      %p129 = pnand %p127, %p128
      %p130 = pneg %p129
      // Predicated region
      $region25: #{tpu_custom_call.1} parent=5 // pred_check
        _
      $region26: #{tpu_custom_call.1} parent=5 // pred_check_branch
        %132 = sbr.rel (%p129) target = $region28
      $region27: #{tpu_custom_call.1} parent=5 // pred_region
        %s133 = ssub.s32 %s14, 1
        %s134 = sand.u32 %s27, 1
        %s135 = scalar_lea.sflag [#allocation3], %s134
        %s136 = sand.u32 %s27, 1
        %s137 = smul.addr %s136, 4
        %s138 = scalar_lea.vmem [#allocation2], %s137
        // Predicated region
        $region29: #{tpu_custom_call.1} parent=27 // pred_check
          %p139 = pneg %p40
        $region30: #{tpu_custom_call.1} parent=27 // pred_check_branch
          %141 = sbr.rel (%p139) target = $region32
        $region31: #{tpu_custom_call.1} parent=27 // pred_region
          %142 = dma.done %s135, 64
        $region32: #{tpu_custom_call.1} parent=27 // pred_fallthru
          _
        %s143 = sand.u32 %s27, 1
        %s144 = scalar_lea.sflag [#allocation3], %s143
        %s145 = sand.u32 %s27, 1
        %s146 = smul.addr %s145, 4
        %s147 = scalar_lea.vmem [#allocation2], %s146
        %p148 = pneg %p40
        %p149 = pneg %p37
        %p150 = pneg %p61
        %p151 = pneg %p58
        %p152 = pneg %p87
        %p153 = pneg %p84
        %s154 = sand.u32 %s74, 1
        %s155 = scalar_lea.sflag [#allocation4], %s154
        %s156 = sand.u32 %s74, 1
        %s157 = smul.addr %s156, 4
        %s158 = scalar_lea.vmem [#allocation5], %s157
        %v159 = vld [vmem:[%s138] sm:$0xf]
        %v160 = vunpack.c.l.bf16 %v159
        %v161 = vmul.f32 %v160, %v160
        %vm162 = vcmask 261120
        %v163 = vsel %vm162, %v161, 0.0
        %164 = vadd.xlane.f32.xlu0 %v163
        %v165 = vpop.xlane.xlu0 %164
        %v166 = vmul.f32 %v165, 0.03125
        %v167 = vadd.f32 %v166, 1e-06
        %v168 = vrsqrt.pop %v167
        %v169 = vld [vmem:[%s1] sm:$0x1]
        %v170 = vmul.f32 %v160, %v168
        %v172 = vlaneseq
        %v173 = vshrl.u32 %v172, 7
        %v174 = vsub.s32 0, %v173
        %v175 = vrot.slane %v169, %v174
        %v177 = vmul.f32 %v175, %v170
        %v178 = vpack.c.bf16 %v177, %v177
        %vm179 = vcmask 257024
        %180 = vst.msk [vmem:[%s158] sm:$0xf] %vm179, %v178
        %s181 = sand.u32 %s74, 1
        %s182 = scalar_lea.sflag [#allocation4], %s181
        %s183 = sand.u32 %s74, 1
        %s184 = smul.addr %s183, 4
        %s185 = scalar_lea.vmem [#allocation5], %s184
        // Predicated region
        $region33: #{tpu_custom_call.1} parent=27 // pred_check
          %p186 = pneg %p84
        $region34: #{tpu_custom_call.1} parent=27 // pred_check_branch
          %188 = sbr.rel (%p186) target = $region36
        $region35: #{tpu_custom_call.1} parent=27 // pred_region
          %s190 = ssub.s32 64, 64
          %191 = vsyncadd %s182, %s190
          %s192 = smul.addr %s19, 64
          %s193 = scalar_lea.hbm %s2, %s192
          %s195 = sshll.u32 %s185, 4
          %s196 = int_to_ptr.vmem [resolvable:$true] %s195
          %198 = dma.vmem_to_hbm [thread:$0]  %s196, 64, %s193, %s182
        $region36: #{tpu_custom_call.1} parent=27 // pred_fallthru
          _
      $region28: #{tpu_custom_call.1} parent=5 // pred_fallthru
        _
      %p199 = scmp.le.s32.totalorder 2, %s14
      // Predicated region
      $region37: #{tpu_custom_call.1} parent=5 // pred_check
        %p200 = pneg %p199
      $region38: #{tpu_custom_call.1} parent=5 // pred_check_branch
        %202 = sbr.rel (%p200) target = $region40
      $region39: #{tpu_custom_call.1} parent=5 // pred_region
        %s203 = ssub.s32 %s14, 2
        // Predicated region
        $region41: #{tpu_custom_call.1} parent=39 // pred_check
          %p204 = pneg %p90
        $region42: #{tpu_custom_call.1} parent=39 // pred_check_branch
          %206 = sbr.rel (%p204) target = $region44
        $region43: #{tpu_custom_call.1} parent=39 // pred_region
          %s207 = sand.u32 %s75, 1
          %s208 = scalar_lea.sflag [#allocation4], %s207
          %s209 = sand.u32 %s75, 1
          %s210 = smul.addr %s209, 4
          %s211 = scalar_lea.vmem [#allocation5], %s210
          %212 = dma.done %s208, 64
        $region44: #{tpu_custom_call.1} parent=39 // pred_fallthru
          _
      $region40: #{tpu_custom_call.1} parent=5 // pred_fallthru
        _
    $region6: #{tpu_custom_call.1} parent=1 // loop_footer
      %s18 = sadd.s32 1, %s14
    $region7: #{tpu_custom_call.1} parent=1 // loop_footer_branch
      %13 = sbr.rel target = $region3
    $region8: #{tpu_custom_call.1} parent=1 // loop_exit
      _
    %213 = vsyncpa [#allocation3], 1
    %s214 = scalar_lea.sflag [#allocation3], 1
    %215 = vsyncpa %s214, 1
    %216 = vsyncpa [#allocation4], 1
    %s217 = scalar_lea.sflag [#allocation4], 1
    %218 = vsyncpa %s217, 1

</llo_original>
